<compile_context>
chip_gen: v6e
topology: v6e:2x2x1
jax: 0.10.0
libtpu: 0.0.40
codegen_flags: <defaults>
</compile_context>

<pallas_src>
import functools
import math

import jax
import jax.numpy as jnp
from jax.experimental import pallas as pl
from jax.experimental.pallas import tpu as pltpu


def gene_graph_kernel(x_ref, adj_ref, p_ref, out_ref, *,
                      gene_dim, hidden_dim, latent_dim, adj_dim, cell_dim,
                      r_w3, r_w4, r_wl2, r_wbil, r_sel, r_bias):
    x = x_ref[...]
    adj = adj_ref[...].astype(jnp.float32)             # 0/1 multiplicative mask
    add_mask = (adj - 1.0) * jnp.float32(1e30)         # 0 on edges, -1e30 off

    def tconv(xin, in_dim, w_row, b_row, out_ch):
        # One fused MXU matmul for Q | K | V | skip at full slab width
        # (padded lanes are zero weights / zero bias -> harmless).
        w = p_ref[w_row:w_row + in_dim, :]
        b = p_ref[b_row:b_row + 1, :]
        proj = jnp.dot(xin, w, preferred_element_type=jnp.float32) + b
        q = proj[:, 0 * out_ch:1 * out_ch]
        k = proj[:, 1 * out_ch:2 * out_ch]
        v = proj[:, 2 * out_ch:3 * out_ch]
        skip = proj[:, 3 * out_ch:4 * out_ch]
        # q . k^T without materializing a transpose (contract last dim of both).
        s = jax.lax.dot_general(
            q, k, dimension_numbers=(((1,), (1,)), ((), ())),
            preferred_element_type=jnp.float32) * (1.0 / math.sqrt(out_ch))
        s = s + add_mask
        m = jnp.max(s, axis=-1, keepdims=True)
        p = jnp.exp(s - m) * adj
        denom = jnp.sum(p, axis=-1, keepdims=True)
        # Isolated destination nodes (denom == 0) aggregate to zero, matching
        # the PyG segment softmax.
        alpha = p * jnp.where(denom > 0.0, 1.0 / denom, 0.0)
        agg = jnp.dot(alpha, v, preferred_element_type=jnp.float32)
        return agg + skip

    # F.dropout(GeneX, p=0.2, training=False) == identity.
    h = jnp.maximum(tconv(x, gene_dim, r_w3, r_bias + 0, hidden_dim), 0.0)
    z = tconv(h, hidden_dim, r_w4, r_bias + 1, latent_dim)     # conv4 -> z_mean2

    # linear2 (dropout identity in eval mode); full-slab-width matmul + bias.
    wl2 = p_ref[r_wl2:r_wl2 + latent_dim, :]
    bl2 = p_ref[r_bias + 2:r_bias + 3, :]
    h2 = (jnp.dot(z, wl2, preferred_element_type=jnp.float32) + bl2)[:, :adj_dim]

    # bilinear2(h2, h2): out[n, c] = h2[n] @ W[c] @ h2[n] + b[c]
    #   t[n, c*adj + j] = sum_i h2[n, i] * W[c, i, j]       (one lane-dense matmul)
    #   out[n, c]       = sum_j t[n, c*adj + j] * h2[n, j]  (tile + selector matmul)
    wbil = p_ref[r_wbil:r_wbil + adj_dim, :]
    sel = p_ref[r_sel:r_sel + cell_dim * adj_dim, :]
    bbil = p_ref[r_bias + 3:r_bias + 4, :]
    t = jnp.dot(h2, wbil, preferred_element_type=jnp.float32)[:, :cell_dim * adj_dim]
    h2_rep = jnp.tile(h2, (1, cell_dim))                       # (N, cell*adj)
    bil = jnp.dot(t * h2_rep, sel, preferred_element_type=jnp.float32) + bbil
    cell_out = jax.nn.sigmoid(bil[:, :cell_dim])

    # Single lane-dense output slab: [ CellDecoder | z_mean2 | zero pad ]
    n = x.shape[0]
    pad = out_ref.shape[1] - (cell_dim + latent_dim)
    out_ref[...] = jnp.concatenate(
        [cell_out, z, jnp.zeros((n, pad), jnp.float32)], axis=1)


def gene_graph_forward(gene_x, edge_index, params):
    n, gene_dim = gene_x.shape
    hidden_dim = params["wq3"].shape[1]
    latent_dim = params["wq4"].shape[1]
    adj_dim = params["wl2"].shape[1]
    cell_dim = params["wbil"].shape[0]

    # Dense 0/1 adjacency: row = destination node, col = source node.
    # Stored as bf16 (0/1 exact) -> half the O(N^2) mask bytes.
    src, dst = edge_index[0], edge_index[1]
    adj = jnp.zeros((n, n), jnp.float32).at[dst, src].set(1.0).astype(jnp.bfloat16)

    # Fused projection slabs: [Q | K | V | skip] along the output dim.
    w3 = jnp.concatenate([params["wq3"], params["wk3"],
                          params["wv3"], params["ws3"]], axis=1)
    w4 = jnp.concatenate([params["wq4"], params["wk4"],
                          params["wv4"], params["ws4"]], axis=1)
    b3 = jnp.concatenate([params["bq3"], params["bk3"],
                          params["bv3"], params["bs3"]], axis=1)
    b4 = jnp.concatenate([params["bq4"], params["bk4"],
                          params["bv4"], params["bs4"]], axis=1)

    # wbil_flat[i, c*adj + j] = W[c, i, j]  (lane-dense: cell*adj columns)
    wbil_flat = jnp.transpose(params["wbil"], (1, 0, 2)).reshape(
        adj_dim, cell_dim * adj_dim)
    # Block-diagonal ones selector reducing each adj-wide lane block to one lane.
    rows = jnp.arange(cell_dim * adj_dim)
    sel = jnp.zeros((cell_dim * adj_dim, cell_dim),
                    jnp.float32).at[rows, rows // adj_dim].set(1.0)

    # ---- pack EVERY parameter into one lane-dense slab (3 kernel inputs total) --
    slab_w = max(4 * hidden_dim, 4 * latent_dim, adj_dim,
                 cell_dim * adj_dim, cell_dim)
    slab_w = ((slab_w + 127) // 128) * 128

    def _rows8(r):
        return ((r + 7) // 8) * 8

    def _pad_block(a, rows):
        return jnp.pad(a, ((0, rows - a.shape[0]), (0, slab_w - a.shape[1])))

    bias_block = jnp.concatenate(
        [jnp.pad(b.reshape(1, -1), ((0, 0), (0, slab_w - b.shape[-1])))
         for b in (b3, b4, params["bl2"], params["bbil"])], axis=0)

    blocks = [(w3, gene_dim), (w4, hidden_dim), (params["wl2"], latent_dim),
              (wbil_flat, adj_dim), (sel, cell_dim * adj_dim), (bias_block, 4)]
    offsets, off = [], 0
    padded = []
    for arr, nrows in blocks:
        offsets.append(off)
        rpad = _rows8(nrows)
        padded.append(_pad_block(arr, rpad))
        off += rpad
    p_slab = jnp.concatenate(padded, axis=0)
    r_w3, r_w4, r_wl2, r_wbil, r_sel, r_bias = offsets

    out_w = ((cell_dim + latent_dim + 127) // 128) * 128

    # ---- cost / VMEM hints ----------------------------------------------------
    flops = 2 * n * (gene_dim * 4 * hidden_dim + hidden_dim * 4 * latent_dim
                     + latent_dim * adj_dim + adj_dim * cell_dim * adj_dim
                     + cell_dim * adj_dim * cell_dim) \
            + 2 * n * n * (2 * hidden_dim + 2 * latent_dim)
    transcendentals = 2 * n * n + n * cell_dim
    bytes_accessed = (gene_x.size * 4 + adj.size * 2 + p_slab.size * 4
                      + n * out_w * 4)
    # Intermediates: scores/masks O(N^2) f32 plus double-buffered I/O, 32 MiB floor
    # (>= default scoped limit on all chips), capped below v7x physical VMEM.
    vmem_need = 2 * bytes_accessed + 6 * n * n * 4 + (1 << 20)
    vmem_limit = int(min(60 << 20, max(vmem_need, 32 << 20)))

    kern = functools.partial(
        gene_graph_kernel, gene_dim=gene_dim, hidden_dim=hidden_dim,
        latent_dim=latent_dim, adj_dim=adj_dim, cell_dim=cell_dim,
        r_w3=r_w3, r_w4=r_w4, r_wl2=r_wl2, r_wbil=r_wbil, r_sel=r_sel,
        r_bias=r_bias)
    vmem = pl.BlockSpec(memory_space=pltpu.MemorySpace.VMEM)

    out = pl.pallas_call(
        kern,
        out_shape=jax.ShapeDtypeStruct((n, out_w), jnp.float32),
        in_specs=[vmem, vmem, vmem],
        out_specs=vmem,
        compiler_params=pltpu.CompilerParams(vmem_limit_bytes=vmem_limit),
        cost_estimate=pl.CostEstimate(flops=flops,
                                      transcendentals=transcendentals,
                                      bytes_accessed=bytes_accessed),
    )(gene_x.astype(jnp.float32), adj, p_slab)

    cell_dec = out[:, :cell_dim]
    z_mean2 = out[:, cell_dim:cell_dim + latent_dim]
    return cell_dec, z_mean2


def init_params(key, gene_dim, cell_dim, hidden_dim, latent_dim, adj_dim):
    ks = jax.random.split(key, 24)
    w = lambda k, shp: 0.1 * jax.random.normal(k, shp, jnp.float32)
    p = {}
    # conv3: TransformerConv(gene_dim, hidden_dim) — lin_query/key/value/skip (+biases)
    p["wq3"], p["bq3"] = w(ks[0], (gene_dim, hidden_dim)), w(ks[1], (1, hidden_dim))
    p["wk3"], p["bk3"] = w(ks[2], (gene_dim, hidden_dim)), w(ks[3], (1, hidden_dim))
    p["wv3"], p["bv3"] = w(ks[4], (gene_dim, hidden_dim)), w(ks[5], (1, hidden_dim))
    p["ws3"], p["bs3"] = w(ks[6], (gene_dim, hidden_dim)), w(ks[7], (1, hidden_dim))
    # conv4: TransformerConv(hidden_dim, latent_dim)
    p["wq4"], p["bq4"] = w(ks[8], (hidden_dim, latent_dim)), w(ks[9], (1, latent_dim))
    p["wk4"], p["bk4"] = w(ks[10], (hidden_dim, latent_dim)), w(ks[11], (1, latent_dim))
    p["wv4"], p["bv4"] = w(ks[12], (hidden_dim, latent_dim)), w(ks[13], (1, latent_dim))
    p["ws4"], p["bs4"] = w(ks[14], (hidden_dim, latent_dim)), w(ks[15], (1, latent_dim))
    # linear2: Linear(latent_dim, adj_dim)  (stored pre-transposed: x @ W)
    p["wl2"], p["bl2"] = w(ks[16], (latent_dim, adj_dim)), w(ks[17], (1, adj_dim))
    # bilinear2: Bilinear(adj_dim, adj_dim, cell_dim)
    p["wbil"], p["bbil"] = w(ks[18], (cell_dim, adj_dim, adj_dim)), w(ks[19], (1, cell_dim))
    return p


def _reference_forward(gene_x, edge_index, params):
    """Pure-JAX reference of the same math, for a correctness check."""
    n = gene_x.shape[0]
    mask = jnp.zeros((n, n), jnp.float32).at[edge_index[1], edge_index[0]].set(1.0)

    def tconv(x, a, b, c, d, e, f, g, h):
        out_ch = a.shape[1]
        q, k, v = x @ a + b, x @ c + d, x @ e + f
        s = (q @ k.T) / math.sqrt(out_ch)
        s = jnp.where(mask > 0, s, -1e30)
        p = jnp.where(mask > 0, jnp.exp(s - s.max(-1, keepdims=True)), 0.0)
        den = p.sum(-1, keepdims=True)
        alpha = p * jnp.where(den > 0, 1.0 / den, 0.0)
        return alpha @ v + (x @ g + h)

    hh = jax.nn.relu(tconv(gene_x, params["wq3"], params["bq3"], params["wk3"], params["bk3"],
                           params["wv3"], params["bv3"], params["ws3"], params["bs3"]))
    z = tconv(hh, params["wq4"], params["bq4"], params["wk4"], params["bk4"],
              params["wv4"], params["bv4"], params["ws4"], params["bs4"])
    h2 = z @ params["wl2"] + params["bl2"]
    bil = jnp.einsum("ni,cij,nj->nc", h2, params["wbil"], h2) + params["bbil"]
    return jax.nn.sigmoid(bil), z


if __name__ == "__main__":
    # X.shape = (gene_dim, cell_dim); GeneX nodes carry gene_dim features and the
    # bilinear decoder reconstructs a cell_dim-wide output per node.
    cell_dim = 8        # number of graph nodes == cell_dim (square cell decoder)
    gene_dim = 16       # node feature dim
    hidden_dim, latent_dim, adj_dim = 32, 8, 16

    key = jax.random.PRNGKey(0)
    k_x, k_p = jax.random.split(key)
    gene_x = jax.random.normal(k_x, (cell_dim, gene_dim), jnp.float32)

    # ring graph + self loops so every node has incoming edges
    idx = jnp.arange(cell_dim, dtype=jnp.int32)
    src = jnp.concatenate([idx, idx])
    dst = jnp.concatenate([idx, (idx + 1) % cell_dim])
    edge_index = jnp.stack([src, dst], axis=0)

    params = init_params(k_p, gene_dim, cell_dim, hidden_dim, latent_dim, adj_dim)

    cell_dec, z_mean2 = gene_graph_forward(gene_x, edge_index, params)
    jax.block_until_ready((cell_dec, z_mean2))

    ref_cell, ref_z = _reference_forward(gene_x, edge_index, params)
    assert cell_dec.shape == (cell_dim, cell_dim)
    assert z_mean2.shape == (cell_dim, latent_dim)
    assert jnp.allclose(cell_dec, ref_cell, atol=1e-5, rtol=1e-5)
    assert jnp.allclose(z_mean2, ref_z, atol=1e-5, rtol=1e-5)
    print("KERNEL_OK")
</pallas_src>

<mosaic_0001>
module attributes {stable_mosaic.version = 11 : i64} {
  func.func @gene_graph_kernel(%arg0: memref<8x16xf32, #tpu.memory_space<vmem>>, %arg1: memref<8x8xbf16, #tpu.memory_space<vmem>>, %arg2: memref<208x128xf32, #tpu.memory_space<vmem>>, %arg3: memref<8x128xf32, #tpu.memory_space<vmem>>) attributes {dimension_semantics = [], scalar_prefetch = 0 : i64, scratch_operands = 0 : i64, tpu.core_type = #tpu.core_type<tc>} {
    %c0 = arith.constant 0 : index
    %c0_0 = arith.constant 0 : index
    %0 = vector.load %arg0[%c0, %c0_0] : memref<8x16xf32, #tpu.memory_space<vmem>>, vector<8x16xf32>
    %c0_1 = arith.constant 0 : index
    %c0_2 = arith.constant 0 : index
    %1 = vector.load %arg1[%c0_1, %c0_2] : memref<8x8xbf16, #tpu.memory_space<vmem>>, vector<8x8xbf16>
    %2 = arith.extf %1 : vector<8x8xbf16> to vector<8x8xf32>
    %cst = arith.constant 1.000000e+00 : f32
    %3 = vector.broadcast %cst : f32 to vector<8x8xf32>
    %4 = arith.subf %2, %3 : vector<8x8xf32>
    %cst_3 = arith.constant 1.000000e+30 : f32
    %5 = vector.broadcast %cst_3 : f32 to vector<8x8xf32>
    %6 = arith.mulf %4, %5 : vector<8x8xf32>
    %c0_4 = arith.constant 0 : index
    %c0_5 = arith.constant 0 : index
    %7 = vector.load %arg2[%c0_4, %c0_5] : memref<208x128xf32, #tpu.memory_space<vmem>>, vector<16x128xf32>
    %c200 = arith.constant 200 : index
    %c0_6 = arith.constant 0 : index
    %8 = vector.load %arg2[%c200, %c0_6] : memref<208x128xf32, #tpu.memory_space<vmem>>, vector<1x128xf32>
    %cst_7 = arith.constant dense<0.000000e+00> : vector<8x128xf32>
    %9 = tpu.matmul %0, %7, %cst_7 {dimension_numbers = #tpu.dot_dimension_numbers<[1], [0], [0], [1], [0, 0, 1, 1], [], []>} : vector<8x16xf32>, vector<16x128xf32>, vector<8x128xf32> -> vector<8x128xf32>
    %10 = vector.broadcast %8 : vector<1x128xf32> to vector<8x128xf32>
    %11 = arith.addf %9, %10 : vector<8x128xf32>
    %12 = vector.extract_strided_slice %11 {offsets = [0, 0], sizes = [8, 32], strides = [1, 1]} : vector<8x128xf32> to vector<8x32xf32>
    %13 = vector.extract_strided_slice %11 {offsets = [0, 32], sizes = [8, 32], strides = [1, 1]} : vector<8x128xf32> to vector<8x32xf32>
    %14 = vector.extract_strided_slice %11 {offsets = [0, 64], sizes = [8, 32], strides = [1, 1]} : vector<8x128xf32> to vector<8x32xf32>
    %15 = vector.extract_strided_slice %11 {offsets = [0, 96], sizes = [8, 32], strides = [1, 1]} : vector<8x128xf32> to vector<8x32xf32>
    %cst_8 = arith.constant dense<0.000000e+00> : vector<8x8xf32>
    %16 = tpu.matmul %12, %13, %cst_8 {dimension_numbers = #tpu.dot_dimension_numbers<[1], [1], [0], [0], [0, 0, 1, 0], [], []>} : vector<8x32xf32>, vector<8x32xf32>, vector<8x8xf32> -> vector<8x8xf32>
    %cst_9 = arith.constant 0.176776692 : f32
    %17 = vector.broadcast %cst_9 : f32 to vector<8x8xf32>
    %18 = arith.mulf %16, %17 : vector<8x8xf32>
    %19 = arith.addf %18, %6 : vector<8x8xf32>
    %cst_10 = arith.constant dense<0xFF800000> : vector<8xf32>
    %20 = vector.multi_reduction <maximumf>, %19, %cst_10 [1] : vector<8x8xf32> to vector<8xf32>
    %21 = vector.shape_cast %20 : vector<8xf32> to vector<8x1xf32>
    %22 = vector.broadcast %21 : vector<8x1xf32> to vector<8x8xf32>
    %23 = arith.subf %19, %22 : vector<8x8xf32>
    %24 = math.exp %23 : vector<8x8xf32>
    %25 = arith.mulf %24, %2 : vector<8x8xf32>
    %cst_11 = arith.constant dense<0.000000e+00> : vector<8xf32>
    %26 = vector.multi_reduction <add>, %25, %cst_11 [1] : vector<8x8xf32> to vector<8xf32>
    %27 = vector.shape_cast %26 : vector<8xf32> to vector<8x1xf32>
    %cst_12 = arith.constant 0.000000e+00 : f32
    %28 = vector.broadcast %cst_12 : f32 to vector<8x1xf32>
    %29 = arith.cmpf ogt, %27, %28 : vector<8x1xf32>
    %cst_13 = arith.constant 1.000000e+00 : f32
    %30 = vector.broadcast %cst_13 : f32 to vector<8x1xf32>
    %31 = arith.divf %30, %27 : vector<8x1xf32>
    %cst_14 = arith.constant 0.000000e+00 : f32
    %32 = vector.broadcast %cst_14 : f32 to vector<8x1xf32>
    %33 = arith.select %29, %31, %32 : vector<8x1xi1>, vector<8x1xf32>
    %34 = vector.broadcast %33 : vector<8x1xf32> to vector<8x8xf32>
    %35 = arith.mulf %25, %34 : vector<8x8xf32>
    %cst_15 = arith.constant dense<0.000000e+00> : vector<8x32xf32>
    %36 = tpu.matmul %35, %14, %cst_15 {dimension_numbers = #tpu.dot_dimension_numbers<[1], [0], [0], [1], [0, 0, 1, 1], [], []>} : vector<8x8xf32>, vector<8x32xf32>, vector<8x32xf32> -> vector<8x32xf32>
    %37 = arith.addf %36, %15 : vector<8x32xf32>
    %cst_16 = arith.constant 0.000000e+00 : f32
    %38 = vector.broadcast %cst_16 : f32 to vector<8x32xf32>
    %39 = arith.maximumf %37, %38 : vector<8x32xf32>
    %c16 = arith.constant 16 : index
    %c0_17 = arith.constant 0 : index
    %40 = vector.load %arg2[%c16, %c0_17] : memref<208x128xf32, #tpu.memory_space<vmem>>, vector<32x128xf32>
    %c201 = arith.constant 201 : index
    %c0_18 = arith.constant 0 : index
    %41 = vector.load %arg2[%c201, %c0_18] : memref<208x128xf32, #tpu.memory_space<vmem>>, vector<1x128xf32>
    %cst_19 = arith.constant dense<0.000000e+00> : vector<8x128xf32>
    %42 = tpu.matmul %39, %40, %cst_19 {dimension_numbers = #tpu.dot_dimension_numbers<[1], [0], [0], [1], [0, 0, 1, 1], [], []>} : vector<8x32xf32>, vector<32x128xf32>, vector<8x128xf32> -> vector<8x128xf32>
    %43 = vector.broadcast %41 : vector<1x128xf32> to vector<8x128xf32>
    %44 = arith.addf %42, %43 : vector<8x128xf32>
    %45 = vector.extract_strided_slice %44 {offsets = [0, 0], sizes = [8, 8], strides = [1, 1]} : vector<8x128xf32> to vector<8x8xf32>
    %46 = vector.extract_strided_slice %44 {offsets = [0, 8], sizes = [8, 8], strides = [1, 1]} : vector<8x128xf32> to vector<8x8xf32>
    %47 = vector.extract_strided_slice %44 {offsets = [0, 16], sizes = [8, 8], strides = [1, 1]} : vector<8x128xf32> to vector<8x8xf32>
    %48 = vector.extract_strided_slice %44 {offsets = [0, 24], sizes = [8, 8], strides = [1, 1]} : vector<8x128xf32> to vector<8x8xf32>
    %cst_20 = arith.constant dense<0.000000e+00> : vector<8x8xf32>
    %49 = tpu.matmul %45, %46, %cst_20 {dimension_numbers = #tpu.dot_dimension_numbers<[1], [1], [0], [0], [0, 0, 1, 0], [], []>} : vector<8x8xf32>, vector<8x8xf32>, vector<8x8xf32> -> vector<8x8xf32>
    %cst_21 = arith.constant 0.353553385 : f32
    %50 = vector.broadcast %cst_21 : f32 to vector<8x8xf32>
    %51 = arith.mulf %49, %50 : vector<8x8xf32>
    %52 = arith.addf %51, %6 : vector<8x8xf32>
    %cst_22 = arith.constant dense<0xFF800000> : vector<8xf32>
    %53 = vector.multi_reduction <maximumf>, %52, %cst_22 [1] : vector<8x8xf32> to vector<8xf32>
    %54 = vector.shape_cast %53 : vector<8xf32> to vector<8x1xf32>
    %55 = vector.broadcast %54 : vector<8x1xf32> to vector<8x8xf32>
    %56 = arith.subf %52, %55 : vector<8x8xf32>
    %57 = math.exp %56 : vector<8x8xf32>
    %58 = arith.mulf %57, %2 : vector<8x8xf32>
    %cst_23 = arith.constant dense<0.000000e+00> : vector<8xf32>
    %59 = vector.multi_reduction <add>, %58, %cst_23 [1] : vector<8x8xf32> to vector<8xf32>
    %60 = vector.shape_cast %59 : vector<8xf32> to vector<8x1xf32>
    %cst_24 = arith.constant 0.000000e+00 : f32
    %61 = vector.broadcast %cst_24 : f32 to vector<8x1xf32>
    %62 = arith.cmpf ogt, %60, %61 : vector<8x1xf32>
    %cst_25 = arith.constant 1.000000e+00 : f32
    %63 = vector.broadcast %cst_25 : f32 to vector<8x1xf32>
    %64 = arith.divf %63, %60 : vector<8x1xf32>
    %cst_26 = arith.constant 0.000000e+00 : f32
    %65 = vector.broadcast %cst_26 : f32 to vector<8x1xf32>
    %66 = arith.select %62, %64, %65 : vector<8x1xi1>, vector<8x1xf32>
    %67 = vector.broadcast %66 : vector<8x1xf32> to vector<8x8xf32>
    %68 = arith.mulf %58, %67 : vector<8x8xf32>
    %cst_27 = arith.constant dense<0.000000e+00> : vector<8x8xf32>
    %69 = tpu.matmul %68, %47, %cst_27 {dimension_numbers = #tpu.dot_dimension_numbers<[1], [0], [0], [1], [0, 0, 1, 1], [], []>} : vector<8x8xf32>, vector<8x8xf32>, vector<8x8xf32> -> vector<8x8xf32>
    %70 = arith.addf %69, %48 : vector<8x8xf32>
    %c48 = arith.constant 48 : index
    %c0_28 = arith.constant 0 : index
    %71 = vector.load %arg2[%c48, %c0_28] : memref<208x128xf32, #tpu.memory_space<vmem>>, vector<8x128xf32>
    %c202 = arith.constant 202 : index
    %c0_29 = arith.constant 0 : index
    %72 = vector.load %arg2[%c202, %c0_29] : memref<208x128xf32, #tpu.memory_space<vmem>>, vector<1x128xf32>
    %cst_30 = arith.constant dense<0.000000e+00> : vector<8x128xf32>
    %73 = tpu.matmul %70, %71, %cst_30 {dimension_numbers = #tpu.dot_dimension_numbers<[1], [0], [0], [1], [0, 0, 1, 1], [], []>} : vector<8x8xf32>, vector<8x128xf32>, vector<8x128xf32> -> vector<8x128xf32>
    %74 = vector.broadcast %72 : vector<1x128xf32> to vector<8x128xf32>
    %75 = arith.addf %73, %74 : vector<8x128xf32>
    %76 = vector.extract_strided_slice %75 {offsets = [0, 0], sizes = [8, 16], strides = [1, 1]} : vector<8x128xf32> to vector<8x16xf32>
    %c56 = arith.constant 56 : index
    %c0_31 = arith.constant 0 : index
    %77 = vector.load %arg2[%c56, %c0_31] : memref<208x128xf32, #tpu.memory_space<vmem>>, vector<16x128xf32>
    %c72 = arith.constant 72 : index
    %c0_32 = arith.constant 0 : index
    %78 = vector.load %arg2[%c72, %c0_32] : memref<208x128xf32, #tpu.memory_space<vmem>>, vector<128x128xf32>
    %c203 = arith.constant 203 : index
    %c0_33 = arith.constant 0 : index
    %79 = vector.load %arg2[%c203, %c0_33] : memref<208x128xf32, #tpu.memory_space<vmem>>, vector<1x128xf32>
    %cst_34 = arith.constant dense<0.000000e+00> : vector<8x128xf32>
    %80 = tpu.matmul %76, %77, %cst_34 {dimension_numbers = #tpu.dot_dimension_numbers<[1], [0], [0], [1], [0, 0, 1, 1], [], []>} : vector<8x16xf32>, vector<16x128xf32>, vector<8x128xf32> -> vector<8x128xf32>
    %81 = tpu.concatenate %76, %76, %76, %76, %76, %76, %76, %76 in 1 : vector<8x16xf32>, vector<8x16xf32>, vector<8x16xf32>, vector<8x16xf32>, vector<8x16xf32>, vector<8x16xf32>, vector<8x16xf32>, vector<8x16xf32> -> vector<8x128xf32>
    %82 = arith.mulf %80, %81 : vector<8x128xf32>
    %cst_35 = arith.constant dense<0.000000e+00> : vector<8x128xf32>
    %83 = tpu.matmul %82, %78, %cst_35 {dimension_numbers = #tpu.dot_dimension_numbers<[1], [0], [0], [1], [0, 0, 1, 1], [], []>} : vector<8x128xf32>, vector<128x128xf32>, vector<8x128xf32> -> vector<8x128xf32>
    %84 = vector.broadcast %79 : vector<1x128xf32> to vector<8x128xf32>
    %85 = arith.addf %83, %84 : vector<8x128xf32>
    %86 = vector.extract_strided_slice %85 {offsets = [0, 0], sizes = [8, 8], strides = [1, 1]} : vector<8x128xf32> to vector<8x8xf32>
    %87 = arith.negf %86 : vector<8x8xf32>
    %88 = math.exp %87 : vector<8x8xf32>
    %cst_36 = arith.constant 1.000000e+00 : f32
    %89 = vector.broadcast %cst_36 : f32 to vector<8x8xf32>
    %90 = arith.addf %89, %88 : vector<8x8xf32>
    %91 = arith.divf %89, %90 : vector<8x8xf32>
    %cst_37 = arith.constant 0.000000e+00 : f32
    %92 = vector.broadcast %cst_37 : f32 to vector<8x112xf32>
    %93 = tpu.concatenate %91, %70, %92 in 1 : vector<8x8xf32>, vector<8x8xf32>, vector<8x112xf32> -> vector<8x128xf32>
    %c0_38 = arith.constant 0 : index
    %c0_39 = arith.constant 0 : index
    %94 = vector.load %arg3[%c0_38, %c0_39] : memref<8x128xf32, #tpu.memory_space<vmem>>, vector<8x128xf32>
    tpu.vector_store %arg3[%c0_38, %c0_39], %93 {strides = array<i32>} : memref<8x128xf32, #tpu.memory_space<vmem>>, vector<8x128xf32>,
    return
  }
}

</mosaic_0001>

<llo_original>
// kernel: tpu_custom_call.1
$region0: #{tpu_custom_call.1}
  #allocation0 [shape = 'u32[]', space=smem, size = 0x4, offset = 0x4, fixed_abs, tag = 'smem constant byte address 0x4 - core index']
  #allocation1 [shape = 'u32[144,128]{1,0:T(1,128)}', space=vmem, size = 0x12000, scoped, tag = 'internal scratch']
  %s0 = inlined_call_operand.hbm [shape: f32[8,16], index: 0, kind: input, shape index: {}]
  %s1 = inlined_call_operand.hbm [shape: bf16[8,8], index: 1, kind: input, shape index: {}]
  %s2 = inlined_call_operand.hbm [shape: f32[208,128], index: 2, kind: input, shape index: {}]
  %s3 = inlined_call_operand.hbm [shape: f32[8,128], index: 3, kind: output, shape index: {}]
  %s4 = sld [smem:[#allocation0]]
  $region34: #{tpu_custom_call.1} parent=0
    _
  %s6 = ssub.s32 1, %s4
  %s7 = scalar_select 0, %s6, %s4
  $region1: #{tpu_custom_call.1} parent=0
    #allocation2 [shape = 'u8[4096]{0}', space=vmem, size = 0x1000, scoped, tag = 'input window, operand 0, single buffered']
    #allocation3 [shape = 's32[1]{0}', space=sflag, size = 0x4, scoped, tag = 'scoped memory for tpu_custom_call.1']
    #allocation4 [shape = 's32[1]{0}', space=sflag, size = 0x4, scoped, tag = 'scoped memory for tpu_custom_call.1']
    #allocation5 [shape = 'u8[2048]{0}', space=vmem, size = 0x800, scoped, tag = 'input window, operand 1, single buffered']
    #allocation6 [shape = 's32[1]{0}', space=sflag, size = 0x4, scoped, tag = 'scoped memory for tpu_custom_call.1']
    #allocation7 [shape = 'u8[106496]{0}', space=vmem, size = 0x1a000, scoped, tag = 'input window, operand 2, single buffered']
    #allocation8 [shape = 'u8[4096]{0}', space=vmem, size = 0x1000, scoped, tag = 'output window, operand 0, single buffered']
    %8 = vsyncpa [#allocation3], 0
    %9 = vsyncpa [#allocation6], 0
    %10 = vsyncpa [#allocation4], 0
    // Predicated region
    $region2: #{tpu_custom_call.1} parent=1 // pred_check
      _
    $region3: #{tpu_custom_call.1} parent=1 // pred_check_branch
      %12 = sbr.rel (0) target = $region5
    $region4: #{tpu_custom_call.1} parent=1 // pred_region
      %s14 = ssub.s32 128, 128
      %15 = vsyncadd [#allocation3], %s14
      %s17 = sshll.u32 [#allocation2], 4
      %s18 = int_to_ptr.vmem [resolvable:$true] %s17
      %20 = dma.hbm_to_vmem [thread:$0]  %s0, 128, %s18, [#allocation3]
    $region5: #{tpu_custom_call.1} parent=1 // pred_fallthru
      _
    // Predicated region
    $region6: #{tpu_custom_call.1} parent=1 // pred_check
      _
    $region7: #{tpu_custom_call.1} parent=1 // pred_check_branch
      %22 = sbr.rel (0) target = $region9
    $region8: #{tpu_custom_call.1} parent=1 // pred_region
      %s24 = ssub.s32 64, 64
      %25 = vsyncadd [#allocation6], %s24
      %s27 = sshll.u32 [#allocation5], 4
      %s28 = int_to_ptr.vmem [resolvable:$true] %s27
      %30 = dma.hbm_to_vmem [thread:$0]  %s1, 64, %s28, [#allocation6]
    $region9: #{tpu_custom_call.1} parent=1 // pred_fallthru
      _
    // Predicated region
    $region10: #{tpu_custom_call.1} parent=1 // pred_check
      _
    $region11: #{tpu_custom_call.1} parent=1 // pred_check_branch
      %32 = sbr.rel (0) target = $region13
    $region12: #{tpu_custom_call.1} parent=1 // pred_region
      %s34 = ssub.s32 3328, 3328
      %35 = vsyncadd [#allocation6], %s34
      %s36 = sshll.u32 [#allocation7], 4
      %s37 = int_to_ptr.vmem [resolvable:$true] %s36
      %42 = dma.hbm_to_vmem [thread:$0]  %s2, 3328, %s37, [#allocation6], 128, 128, 8
    $region13: #{tpu_custom_call.1} parent=1 // pred_fallthru
      _
    // Predicated region
    $region14: #{tpu_custom_call.1} parent=1 // pred_check
      _
    $region15: #{tpu_custom_call.1} parent=1 // pred_check_branch
      %44 = sbr.rel (0) target = $region17
    $region16: #{tpu_custom_call.1} parent=1 // pred_region
      %45 = dma.done [#allocation3], 128
    $region17: #{tpu_custom_call.1} parent=1 // pred_fallthru
      _
    // Predicated region
    $region18: #{tpu_custom_call.1} parent=1 // pred_check
      _
    $region19: #{tpu_custom_call.1} parent=1 // pred_check_branch
      %47 = sbr.rel (0) target = $region21
    $region20: #{tpu_custom_call.1} parent=1 // pred_region
      %48 = dma.done [#allocation6], 64
    $region21: #{tpu_custom_call.1} parent=1 // pred_fallthru
      _
    // Predicated region
    $region22: #{tpu_custom_call.1} parent=1 // pred_check
      _
    $region23: #{tpu_custom_call.1} parent=1 // pred_check_branch
      %50 = sbr.rel (0) target = $region25
    $region24: #{tpu_custom_call.1} parent=1 // pred_region
      %51 = dma.done [#allocation6], 3328
    $region25: #{tpu_custom_call.1} parent=1 // pred_fallthru
      _
    %v52 = vld [vmem:[#allocation2] sm:$0xff]
    %v53 = vld [vmem:[#allocation5] sm:$0xf]
    %v54 = vunpack.c.l.bf16 %v53
    %v55 = vsub.f32 %v54, 1.0
    %v56 = vmul.f32 %v55, 1e+30
    %v57 = vld [vmem:[#allocation7] sm:$0xff]
    %v58 = vld [vmem:[#allocation7 + $0x8] sm:$0xff]
    %v59 = vld [vmem:[#allocation7 + $0xc8] sm:$0x1]
    %v60 = vlaneseq
    %v61 = vshrl.u32 %v60, 7
    %v62 = vsub.s32 0, %v61
    %v63 = vrot.slane %v59, %v62
    %vm64 = vcmask 130048
    %v66 = vsel %vm64, %v52, 0
    %68 = vmatprep.subr.mxu0 0.0
    %69 = vmatpush1.msra.mxu0 0.0
    %70 = vmatprep.subr.mxu0 0.0
    %71 = vmatpush1.msra.mxu0 0.0
    %72 = vmatprep.subr.mxu0 0.0
    %73 = vmatpush1.msra.mxu0 0.0
    %74 = vmatprep.subr.mxu0 0.0
    %75 = vmatpush1.msra.mxu0 0.0
    %76 = vmatprep.subr.mxu0 0.0
    %77 = vmatpush1.msra.mxu0 0.0
    %78 = vmatprep.subr.mxu0 0.0
    %79 = vmatpush1.msra.mxu0 0.0
    %80 = vmatprep.subr.mxu0 0.0
    %81 = vmatpush1.msra.mxu0 0.0
    %82 = vmatprep.subr.mxu0 0.0
    %83 = vmatpush1.msra.mxu0 0.0
    %84 = vmatprep.subr.mxu0 0.0
    %85 = vmatpush1.msra.mxu0 0.0
    %86 = vmatprep.subr.mxu0 0.0
    %87 = vmatpush1.msra.mxu0 0.0
    %88 = vmatprep.subr.mxu0 0.0
    %89 = vmatpush1.msra.mxu0 0.0
    %90 = vmatprep.subr.mxu0 0.0
    %91 = vmatpush1.msra.mxu0 0.0
    %92 = vmatprep.subr.mxu0 0.0
    %93 = vmatpush1.msra.mxu0 0.0
    %94 = vmatprep.subr.mxu0 0.0
    %95 = vmatpush1.msra.mxu0 0.0
    %96 = vmatprep.subr.mxu0 0.0
    %97 = vmatpush1.msra.mxu0 %v58
    %98 = vmatprep.subr.mxu0 0.0
    %99 = vmatpush1.msra.mxu0 %v57
    %100 = vmatprep.subr.mxu0 0.0
    %101 = vmatpush2.msra.mxu0 0.0
    %102 = vmatprep.subr.mxu0 0.0
    %103 = vmatpush2.msra.mxu0 0.0
    %104 = vmatprep.subr.mxu0 0.0
    %105 = vmatpush2.msra.mxu0 0.0
    %106 = vmatprep.subr.mxu0 0.0
    %107 = vmatpush2.msra.mxu0 0.0
    %108 = vmatprep.subr.mxu0 0.0
    %109 = vmatpush2.msra.mxu0 0.0
    %110 = vmatprep.subr.mxu0 0.0
    %111 = vmatpush2.msra.mxu0 0.0
    %112 = vmatprep.subr.mxu0 0.0
    %113 = vmatpush2.msra.mxu0 0.0
    %114 = vmatprep.subr.mxu0 0.0
    %115 = vmatpush2.msra.mxu0 0.0
    %116 = vmatprep.subr.mxu0 0.0
    %117 = vmatpush2.msra.mxu0 0.0
    %118 = vmatprep.subr.mxu0 0.0
    %119 = vmatpush2.msra.mxu0 0.0
    %120 = vmatprep.subr.mxu0 0.0
    %121 = vmatpush2.msra.mxu0 0.0
    %122 = vmatprep.subr.mxu0 0.0
    %123 = vmatpush2.msra.mxu0 0.0
    %124 = vmatprep.subr.mxu0 0.0
    %125 = vmatpush2.msra.mxu0 0.0
    %126 = vmatprep.subr.mxu0 0.0
    %127 = vmatpush2.msra.mxu0 0.0
    %128 = vmatprep.subr.mxu0 0.0
    %129 = vmatpush2.msra.mxu0 0.0
    %130 = vmatprep.subr.mxu0 0.0
    %131 = vmatpush2.msra.mxu0 0.0
    %132 = vmatprep.mubr.f32.mxu0 0.0
    %133 = vmatmul.mubr.f32.gmra.mxu0 %v66
    %v134 = vpop.f32.mrf.mxu0
    %v135 = vadd.f32 %v63, %v134
    %v136 = vpop.f32.mrf.mxu0
    %137 = vdwg.mxu0
    %139 = vrot.lane.b32.xlu0 %v135, 96
    %v140 = vpop.permute.xlu0 %139
    %vm141 = vcmask 261120
    %v142 = vsel %vm141, %v135, 0
    %v144 = vsel %vm141, %v140, 0
    %146 = vmatprep.subr.mxu0 0.0
    %147 = vmatpush1.xpose.msra.mxu0 0.0
    %148 = vmatprep.subr.mxu0 0.0
    %149 = vmatpush1.xpose.msra.mxu0 0.0
    %150 = vmatprep.subr.mxu0 0.0
    %151 = vmatpush1.xpose.msra.mxu0 0.0
    %152 = vmatprep.subr.mxu0 0.0
    %153 = vmatpush1.xpose.msra.mxu0 0.0
    %154 = vmatprep.subr.mxu0 0.0
    %155 = vmatpush1.xpose.msra.mxu0 0.0
    %156 = vmatprep.subr.mxu0 0.0
    %157 = vmatpush1.xpose.msra.mxu0 0.0
    %158 = vmatprep.subr.mxu0 0.0
    %159 = vmatpush1.xpose.msra.mxu0 0.0
    %160 = vmatprep.subr.mxu0 0.0
    %161 = vmatpush1.xpose.msra.mxu0 0.0
    %162 = vmatprep.subr.mxu0 0.0
    %163 = vmatpush1.xpose.msra.mxu0 0.0
    %164 = vmatprep.subr.mxu0 0.0
    %165 = vmatpush1.xpose.msra.mxu0 0.0
    %166 = vmatprep.subr.mxu0 0.0
    %167 = vmatpush1.xpose.msra.mxu0 0.0
    %168 = vmatprep.subr.mxu0 0.0
    %169 = vmatpush1.xpose.msra.mxu0 0.0
    %170 = vmatprep.subr.mxu0 0.0
    %171 = vmatpush1.xpose.msra.mxu0 0.0
    %172 = vmatprep.subr.mxu0 0.0
    %173 = vmatpush1.xpose.msra.mxu0 0.0
    %174 = vmatprep.subr.mxu0 0.0
    %175 = vmatpush1.xpose.msra.mxu0 0.0
    %176 = vmatprep.subr.mxu0 0.0
    %177 = vmatpush1.xpose.msra.mxu0 %v144
    %178 = vmatprep.subr.mxu0 0.0
    %179 = vmatpush2.xpose.msra.mxu0 0.0
    %180 = vmatprep.subr.mxu0 0.0
    %181 = vmatpush2.xpose.msra.mxu0 0.0
    %182 = vmatprep.subr.mxu0 0.0
    %183 = vmatpush2.xpose.msra.mxu0 0.0
    %184 = vmatprep.subr.mxu0 0.0
    %185 = vmatpush2.xpose.msra.mxu0 0.0
    %186 = vmatprep.subr.mxu0 0.0
    %187 = vmatpush2.xpose.msra.mxu0 0.0
    %188 = vmatprep.subr.mxu0 0.0
    %189 = vmatpush2.xpose.msra.mxu0 0.0
    %190 = vmatprep.subr.mxu0 0.0
    %191 = vmatpush2.xpose.msra.mxu0 0.0
    %192 = vmatprep.subr.mxu0 0.0
    %193 = vmatpush2.xpose.msra.mxu0 0.0
    %194 = vmatprep.subr.mxu0 0.0
    %195 = vmatpush2.xpose.msra.mxu0 0.0
    %196 = vmatprep.subr.mxu0 0.0
    %197 = vmatpush2.xpose.msra.mxu0 0.0
    %198 = vmatprep.subr.mxu0 0.0
    %199 = vmatpush2.xpose.msra.mxu0 0.0
    %200 = vmatprep.subr.mxu0 0.0
    %201 = vmatpush2.xpose.msra.mxu0 0.0
    %202 = vmatprep.subr.mxu0 0.0
    %203 = vmatpush2.xpose.msra.mxu0 0.0
    %204 = vmatprep.subr.mxu0 0.0
    %205 = vmatpush2.xpose.msra.mxu0 0.0
    %206 = vmatprep.subr.mxu0 0.0
    %207 = vmatpush2.xpose.msra.mxu0 0.0
    %208 = vmatprep.subr.mxu0 0.0
    %209 = vmatpush2.xpose.msra.mxu0 0.0
    %210 = vmatprep.mubr.f32.mxu0 0.0
    %211 = vmatmul.mubr.f32.gmra.mxu0 %v142
    %v212 = vpop.f32.mrf.mxu0
    %v213 = vadd.f32 0.0, %v212
    %v214 = vpop.f32.mrf.mxu0
    %215 = vdwg.mxu0
    %v216 = vmul.f32 %v213, 0.17677669
    %v217 = vadd.f32 %v216, %v56
    %vm218 = vcmask 64512
    %v219 = vsel %vm218, %v217, -inf
    %220 = vmax.xlane.f32.xlu0 %v219
    %v221 = vpop.xlane.xlu0 %220
    %v222 = vsub.f32 %v217, %v221
    %v223 = vmul.f32 %v222, 1.442695
    %v224 = vpow.pop %v223
    %v225 = vmul.f32 %v224, %v54
    %v226 = vsel %vm218, %v225, 0.0
    %227 = vadd.xlane.f32.xlu0 %v226
    %v228 = vpop.xlane.xlu0 %227
    %vm229 = vcmp.gt.f32.partialorder %v228, 0.0
    %v230 = vrcp.pop %v228
    %v231 = vmul.f32 1.0, %v230
    %v232 = vsel %vm229, %v231, 0.0
    %v233 = vmul.f32 %v225, %v232
    %234 = vrot.lane.b32.xlu0 %v135, 64
    %v235 = vpop.permute.xlu0 %234
    %237 = vrot.lane.b32.xlu0 %v135, 32
    %v238 = vpop.permute.xlu0 %237
    %v241 = vsel %vm218, %v233, 0
    %243 = vmatprep.subr.mxu0 0.0
    %244 = vmatpush1.msra.mxu0 0.0
    %245 = vmatprep.subr.mxu0 0.0
    %246 = vmatpush1.msra.mxu0 0.0
    %247 = vmatprep.subr.mxu0 0.0
    %248 = vmatpush1.msra.mxu0 0.0
    %249 = vmatprep.subr.mxu0 0.0
    %250 = vmatpush1.msra.mxu0 0.0
    %251 = vmatprep.subr.mxu0 0.0
    %252 = vmatpush1.msra.mxu0 0.0
    %253 = vmatprep.subr.mxu0 0.0
    %254 = vmatpush1.msra.mxu0 0.0
    %255 = vmatprep.subr.mxu0 0.0
    %256 = vmatpush1.msra.mxu0 0.0
    %257 = vmatprep.subr.mxu0 0.0
    %258 = vmatpush1.msra.mxu0 0.0
    %259 = vmatprep.subr.mxu0 0.0
    %260 = vmatpush1.msra.mxu0 0.0
    %261 = vmatprep.subr.mxu0 0.0
    %262 = vmatpush1.msra.mxu0 0.0
    %263 = vmatprep.subr.mxu0 0.0
    %264 = vmatpush1.msra.mxu0 0.0
    %265 = vmatprep.subr.mxu0 0.0
    %266 = vmatpush1.msra.mxu0 0.0
    %267 = vmatprep.subr.mxu0 0.0
    %268 = vmatpush1.msra.mxu0 0.0
    %269 = vmatprep.subr.mxu0 0.0
    %270 = vmatpush1.msra.mxu0 0.0
    %271 = vmatprep.subr.mxu0 0.0
    %272 = vmatpush1.msra.mxu0 0.0
    %273 = vmatprep.subr.mxu0 0.0
    %274 = vmatpush1.msra.mxu0 %v235
    %275 = vmatprep.subr.mxu0 0.0
    %276 = vmatpush2.msra.mxu0 0.0
    %277 = vmatprep.subr.mxu0 0.0
    %278 = vmatpush2.msra.mxu0 0.0
    %279 = vmatprep.subr.mxu0 0.0
    %280 = vmatpush2.msra.mxu0 0.0
    %281 = vmatprep.subr.mxu0 0.0
    %282 = vmatpush2.msra.mxu0 0.0
    %283 = vmatprep.subr.mxu0 0.0
    %284 = vmatpush2.msra.mxu0 0.0
    %285 = vmatprep.subr.mxu0 0.0
    %286 = vmatpush2.msra.mxu0 0.0
    %287 = vmatprep.subr.mxu0 0.0
    %288 = vmatpush2.msra.mxu0 0.0
    %289 = vmatprep.subr.mxu0 0.0
    %290 = vmatpush2.msra.mxu0 0.0
    %291 = vmatprep.subr.mxu0 0.0
    %292 = vmatpush2.msra.mxu0 0.0
    %293 = vmatprep.subr.mxu0 0.0
    %294 = vmatpush2.msra.mxu0 0.0
    %295 = vmatprep.subr.mxu0 0.0
    %296 = vmatpush2.msra.mxu0 0.0
    %297 = vmatprep.subr.mxu0 0.0
    %298 = vmatpush2.msra.mxu0 0.0
    %299 = vmatprep.subr.mxu0 0.0
    %300 = vmatpush2.msra.mxu0 0.0
    %301 = vmatprep.subr.mxu0 0.0
    %302 = vmatpush2.msra.mxu0 0.0
    %303 = vmatprep.subr.mxu0 0.0
    %304 = vmatpush2.msra.mxu0 0.0
    %305 = vmatprep.subr.mxu0 0.0
    %306 = vmatpush2.msra.mxu0 0.0
    %307 = vmatprep.mubr.f32.mxu0 0.0
    %308 = vmatmul.mubr.f32.gmra.mxu0 %v241
    %v309 = vpop.f32.mrf.mxu0
    %v310 = vadd.f32 %v238, %v309
    %v311 = vpop.f32.mrf.mxu0
    %312 = vdwg.mxu0
    %v313 = vmax.f32 %v310, 0.0
    %v314 = vld [vmem:[#allocation7 + $0x10] sm:$0xff]
    %v315 = vld [vmem:[#allocation7 + $0x18] sm:$0xff]
    %v316 = vld [vmem:[#allocation7 + $0x20] sm:$0xff]
    %v317 = vld [vmem:[#allocation7 + $0x28] sm:$0xff]
    %v318 = vld [vmem:[#allocation7 + $0xc9] sm:$0x1]
    %v319 = vlaneseq
    %v320 = vshrl.u32 %v319, 7
    %v321 = vsub.s32 0, %v320
    %v322 = vrot.slane %v318, %v321
    %v324 = vsel %vm141, %v313, 0
    %326 = vmatprep.subr.mxu0 0.0
    %327 = vmatpush1.msra.mxu0 0.0
    %328 = vmatprep.subr.mxu0 0.0
    %329 = vmatpush1.msra.mxu0 0.0
    %330 = vmatprep.subr.mxu0 0.0
    %331 = vmatpush1.msra.mxu0 0.0
    %332 = vmatprep.subr.mxu0 0.0
    %333 = vmatpush1.msra.mxu0 0.0
    %334 = vmatprep.subr.mxu0 0.0
    %335 = vmatpush1.msra.mxu0 0.0
    %336 = vmatprep.subr.mxu0 0.0
    %337 = vmatpush1.msra.mxu0 0.0
    %338 = vmatprep.subr.mxu0 0.0
    %339 = vmatpush1.msra.mxu0 0.0
    %340 = vmatprep.subr.mxu0 0.0
    %341 = vmatpush1.msra.mxu0 0.0
    %342 = vmatprep.subr.mxu0 0.0
    %343 = vmatpush1.msra.mxu0 0.0
    %344 = vmatprep.subr.mxu0 0.0
    %345 = vmatpush1.msra.mxu0 0.0
    %346 = vmatprep.subr.mxu0 0.0
    %347 = vmatpush1.msra.mxu0 0.0
    %348 = vmatprep.subr.mxu0 0.0
    %349 = vmatpush1.msra.mxu0 0.0
    %350 = vmatprep.subr.mxu0 0.0
    %351 = vmatpush1.msra.mxu0 %v317
    %352 = vmatprep.subr.mxu0 0.0
    %353 = vmatpush1.msra.mxu0 %v316
    %354 = vmatprep.subr.mxu0 0.0
    %355 = vmatpush1.msra.mxu0 %v315
    %356 = vmatprep.subr.mxu0 0.0
    %357 = vmatpush1.msra.mxu0 %v314
    %358 = vmatprep.subr.mxu0 0.0
    %359 = vmatpush2.msra.mxu0 0.0
    %360 = vmatprep.subr.mxu0 0.0
    %361 = vmatpush2.msra.mxu0 0.0
    %362 = vmatprep.subr.mxu0 0.0
    %363 = vmatpush2.msra.mxu0 0.0
    %364 = vmatprep.subr.mxu0 0.0
    %365 = vmatpush2.msra.mxu0 0.0
    %366 = vmatprep.subr.mxu0 0.0
    %367 = vmatpush2.msra.mxu0 0.0
    %368 = vmatprep.subr.mxu0 0.0
    %369 = vmatpush2.msra.mxu0 0.0
    %370 = vmatprep.subr.mxu0 0.0
    %371 = vmatpush2.msra.mxu0 0.0
    %372 = vmatprep.subr.mxu0 0.0
    %373 = vmatpush2.msra.mxu0 0.0
    %374 = vmatprep.subr.mxu0 0.0
    %375 = vmatpush2.msra.mxu0 0.0
    %376 = vmatprep.subr.mxu0 0.0
    %377 = vmatpush2.msra.mxu0 0.0
    %378 = vmatprep.subr.mxu0 0.0
    %379 = vmatpush2.msra.mxu0 0.0
    %380 = vmatprep.subr.mxu0 0.0
    %381 = vmatpush2.msra.mxu0 0.0
    %382 = vmatprep.subr.mxu0 0.0
    %383 = vmatpush2.msra.mxu0 0.0
    %384 = vmatprep.subr.mxu0 0.0
    %385 = vmatpush2.msra.mxu0 0.0
    %386 = vmatprep.subr.mxu0 0.0
    %387 = vmatpush2.msra.mxu0 0.0
    %388 = vmatprep.subr.mxu0 0.0
    %389 = vmatpush2.msra.mxu0 0.0
    %390 = vmatprep.mubr.f32.mxu0 0.0
    %391 = vmatmul.mubr.f32.gmra.mxu0 %v324
    %v392 = vpop.f32.mrf.mxu0
    %v393 = vadd.f32 %v322, %v392
    %v394 = vpop.f32.mrf.mxu0
    %395 = vdwg.mxu0
    %397 = vrot.lane.b32.xlu0 %v393, 120
    %v398 = vpop.permute.xlu0 %397
    %v399 = vsel %vm218, %v393, 0
    %v401 = vsel %vm218, %v398, 0
    %403 = vmatprep.subr.mxu0 0.0
    %404 = vmatpush1.xpose.msra.mxu0 0.0
    %405 = vmatprep.subr.mxu0 0.0
    %406 = vmatpush1.xpose.msra.mxu0 0.0
    %407 = vmatprep.subr.mxu0 0.0
    %408 = vmatpush1.xpose.msra.mxu0 0.0
    %409 = vmatprep.subr.mxu0 0.0
    %410 = vmatpush1.xpose.msra.mxu0 0.0
    %411 = vmatprep.subr.mxu0 0.0
    %412 = vmatpush1.xpose.msra.mxu0 0.0
    %413 = vmatprep.subr.mxu0 0.0
    %414 = vmatpush1.xpose.msra.mxu0 0.0
    %415 = vmatprep.subr.mxu0 0.0
    %416 = vmatpush1.xpose.msra.mxu0 0.0
    %417 = vmatprep.subr.mxu0 0.0
    %418 = vmatpush1.xpose.msra.mxu0 0.0
    %419 = vmatprep.subr.mxu0 0.0
    %420 = vmatpush1.xpose.msra.mxu0 0.0
    %421 = vmatprep.subr.mxu0 0.0
    %422 = vmatpush1.xpose.msra.mxu0 0.0
    %423 = vmatprep.subr.mxu0 0.0
    %424 = vmatpush1.xpose.msra.mxu0 0.0
    %425 = vmatprep.subr.mxu0 0.0
    %426 = vmatpush1.xpose.msra.mxu0 0.0
    %427 = vmatprep.subr.mxu0 0.0
    %428 = vmatpush1.xpose.msra.mxu0 0.0
    %429 = vmatprep.subr.mxu0 0.0
    %430 = vmatpush1.xpose.msra.mxu0 0.0
    %431 = vmatprep.subr.mxu0 0.0
    %432 = vmatpush1.xpose.msra.mxu0 0.0
    %433 = vmatprep.subr.mxu0 0.0
    %434 = vmatpush1.xpose.msra.mxu0 %v401
    %435 = vmatprep.subr.mxu0 0.0
    %436 = vmatpush2.xpose.msra.mxu0 0.0
    %437 = vmatprep.subr.mxu0 0.0
    %438 = vmatpush2.xpose.msra.mxu0 0.0
    %439 = vmatprep.subr.mxu0 0.0
    %440 = vmatpush2.xpose.msra.mxu0 0.0
    %441 = vmatprep.subr.mxu0 0.0
    %442 = vmatpush2.xpose.msra.mxu0 0.0
    %443 = vmatprep.subr.mxu0 0.0
    %444 = vmatpush2.xpose.msra.mxu0 0.0
    %445 = vmatprep.subr.mxu0 0.0
    %446 = vmatpush2.xpose.msra.mxu0 0.0
    %447 = vmatprep.subr.mxu0 0.0
    %448 = vmatpush2.xpose.msra.mxu0 0.0
    %449 = vmatprep.subr.mxu0 0.0
    %450 = vmatpush2.xpose.msra.mxu0 0.0
    %451 = vmatprep.subr.mxu0 0.0
    %452 = vmatpush2.xpose.msra.mxu0 0.0
    %453 = vmatprep.subr.mxu0 0.0
    %454 = vmatpush2.xpose.msra.mxu0 0.0
    %455 = vmatprep.subr.mxu0 0.0
    %456 = vmatpush2.xpose.msra.mxu0 0.0
    %457 = vmatprep.subr.mxu0 0.0
    %458 = vmatpush2.xpose.msra.mxu0 0.0
    %459 = vmatprep.subr.mxu0 0.0
    %460 = vmatpush2.xpose.msra.mxu0 0.0
    %461 = vmatprep.subr.mxu0 0.0
    %462 = vmatpush2.xpose.msra.mxu0 0.0
    %463 = vmatprep.subr.mxu0 0.0
    %464 = vmatpush2.xpose.msra.mxu0 0.0
    %465 = vmatprep.subr.mxu0 0.0
    %466 = vmatpush2.xpose.msra.mxu0 0.0
    %467 = vmatprep.mubr.f32.mxu0 0.0
    %468 = vmatmul.mubr.f32.gmra.mxu0 %v399
    %v469 = vpop.f32.mrf.mxu0
    %v470 = vadd.f32 0.0, %v469
    %v471 = vpop.f32.mrf.mxu0
    %472 = vdwg.mxu0
    %v473 = vmul.f32 %v470, 0.35355338
    %v474 = vadd.f32 %v473, %v56
    %v475 = vsel %vm218, %v474, -inf
    %476 = vmax.xlane.f32.xlu0 %v475
    %v477 = vpop.xlane.xlu0 %476
    %v478 = vsub.f32 %v474, %v477
    %v479 = vmul.f32 %v478, 1.442695
    %v480 = vpow.pop %v479
    %v481 = vmul.f32 %v480, %v54
    %v482 = vsel %vm218, %v481, 0.0
    %483 = vadd.xlane.f32.xlu0 %v482
    %v484 = vpop.xlane.xlu0 %483
    %vm485 = vcmp.gt.f32.partialorder %v484, 0.0
    %v486 = vrcp.pop %v484
    %v487 = vmul.f32 1.0, %v486
    %v488 = vsel %vm485, %v487, 0.0
    %v489 = vmul.f32 %v481, %v488
    %490 = vrot.lane.b32.xlu0 %v393, 112
    %v491 = vpop.permute.xlu0 %490
    %493 = vrot.lane.b32.xlu0 %v393, 104
    %v494 = vpop.permute.xlu0 %493
    %v497 = vsel %vm218, %v489, 0
    %499 = vmatprep.subr.mxu0 0.0
    %500 = vmatpush1.msra.mxu0 0.0
    %501 = vmatprep.subr.mxu0 0.0
    %502 = vmatpush1.msra.mxu0 0.0
    %503 = vmatprep.subr.mxu0 0.0
    %504 = vmatpush1.msra.mxu0 0.0
    %505 = vmatprep.subr.mxu0 0.0
    %506 = vmatpush1.msra.mxu0 0.0
    %507 = vmatprep.subr.mxu0 0.0
    %508 = vmatpush1.msra.mxu0 0.0
    %509 = vmatprep.subr.mxu0 0.0
    %510 = vmatpush1.msra.mxu0 0.0
    %511 = vmatprep.subr.mxu0 0.0
    %512 = vmatpush1.msra.mxu0 0.0
    %513 = vmatprep.subr.mxu0 0.0
    %514 = vmatpush1.msra.mxu0 0.0
    %515 = vmatprep.subr.mxu0 0.0
    %516 = vmatpush1.msra.mxu0 0.0
    %517 = vmatprep.subr.mxu0 0.0
    %518 = vmatpush1.msra.mxu0 0.0
    %519 = vmatprep.subr.mxu0 0.0
    %520 = vmatpush1.msra.mxu0 0.0
    %521 = vmatprep.subr.mxu0 0.0
    %522 = vmatpush1.msra.mxu0 0.0
    %523 = vmatprep.subr.mxu0 0.0
    %524 = vmatpush1.msra.mxu0 0.0
    %525 = vmatprep.subr.mxu0 0.0
    %526 = vmatpush1.msra.mxu0 0.0
    %527 = vmatprep.subr.mxu0 0.0
    %528 = vmatpush1.msra.mxu0 0.0
    %529 = vmatprep.subr.mxu0 0.0
    %530 = vmatpush1.msra.mxu0 %v491
    %531 = vmatprep.subr.mxu0 0.0
    %532 = vmatpush2.msra.mxu0 0.0
    %533 = vmatprep.subr.mxu0 0.0
    %534 = vmatpush2.msra.mxu0 0.0
    %535 = vmatprep.subr.mxu0 0.0
    %536 = vmatpush2.msra.mxu0 0.0
    %537 = vmatprep.subr.mxu0 0.0
    %538 = vmatpush2.msra.mxu0 0.0
    %539 = vmatprep.subr.mxu0 0.0
    %540 = vmatpush2.msra.mxu0 0.0
    %541 = vmatprep.subr.mxu0 0.0
    %542 = vmatpush2.msra.mxu0 0.0
    %543 = vmatprep.subr.mxu0 0.0
    %544 = vmatpush2.msra.mxu0 0.0
    %545 = vmatprep.subr.mxu0 0.0
    %546 = vmatpush2.msra.mxu0 0.0
    %547 = vmatprep.subr.mxu0 0.0
    %548 = vmatpush2.msra.mxu0 0.0
    %549 = vmatprep.subr.mxu0 0.0
    %550 = vmatpush2.msra.mxu0 0.0
    %551 = vmatprep.subr.mxu0 0.0
    %552 = vmatpush2.msra.mxu0 0.0
    %553 = vmatprep.subr.mxu0 0.0
    %554 = vmatpush2.msra.mxu0 0.0
    %555 = vmatprep.subr.mxu0 0.0
    %556 = vmatpush2.msra.mxu0 0.0
    %557 = vmatprep.subr.mxu0 0.0
    %558 = vmatpush2.msra.mxu0 0.0
    %559 = vmatprep.subr.mxu0 0.0
    %560 = vmatpush2.msra.mxu0 0.0
    %561 = vmatprep.subr.mxu0 0.0
    %562 = vmatpush2.msra.mxu0 0.0
    %563 = vmatprep.mubr.f32.mxu0 0.0
    %564 = vmatmul.mubr.f32.gmra.mxu0 %v497
    %v565 = vpop.f32.mrf.mxu0
    %v566 = vadd.f32 %v494, %v565
    %v567 = vpop.f32.mrf.mxu0
    %568 = vdwg.mxu0
    %v569 = vld [vmem:[#allocation7 + $0x30] sm:$0xff]
    %v570 = vld [vmem:[#allocation7 + $0xca] sm:$0x1]
    %v571 = vlaneseq
    %v572 = vshrl.u32 %v571, 7
    %v573 = vsub.s32 0, %v572
    %v574 = vrot.slane %v570, %v573
    %v576 = vsel %vm218, %v566, 0
    %578 = vmatprep.subr.mxu0 0.0
    %579 = vmatpush1.msra.mxu0 0.0
    %580 = vmatprep.subr.mxu0 0.0
    %581 = vmatpush1.msra.mxu0 0.0
    %582 = vmatprep.subr.mxu0 0.0
    %583 = vmatpush1.msra.mxu0 0.0
    %584 = vmatprep.subr.mxu0 0.0
    %585 = vmatpush1.msra.mxu0 0.0
    %586 = vmatprep.subr.mxu0 0.0
    %587 = vmatpush1.msra.mxu0 0.0
    %588 = vmatprep.subr.mxu0 0.0
    %589 = vmatpush1.msra.mxu0 0.0
    %590 = vmatprep.subr.mxu0 0.0
    %591 = vmatpush1.msra.mxu0 0.0
    %592 = vmatprep.subr.mxu0 0.0
    %593 = vmatpush1.msra.mxu0 0.0
    %594 = vmatprep.subr.mxu0 0.0
    %595 = vmatpush1.msra.mxu0 0.0
    %596 = vmatprep.subr.mxu0 0.0
    %597 = vmatpush1.msra.mxu0 0.0
    %598 = vmatprep.subr.mxu0 0.0
    %599 = vmatpush1.msra.mxu0 0.0
    %600 = vmatprep.subr.mxu0 0.0
    %601 = vmatpush1.msra.mxu0 0.0
    %602 = vmatprep.subr.mxu0 0.0
    %603 = vmatpush1.msra.mxu0 0.0
    %604 = vmatprep.subr.mxu0 0.0
    %605 = vmatpush1.msra.mxu0 0.0
    %606 = vmatprep.subr.mxu0 0.0
    %607 = vmatpush1.msra.mxu0 0.0
    %608 = vmatprep.subr.mxu0 0.0
    %609 = vmatpush1.msra.mxu0 %v569
    %610 = vmatprep.subr.mxu0 0.0
    %611 = vmatpush2.msra.mxu0 0.0
    %612 = vmatprep.subr.mxu0 0.0
    %613 = vmatpush2.msra.mxu0 0.0
    %614 = vmatprep.subr.mxu0 0.0
    %615 = vmatpush2.msra.mxu0 0.0
    %616 = vmatprep.subr.mxu0 0.0
    %617 = vmatpush2.msra.mxu0 0.0
    %618 = vmatprep.subr.mxu0 0.0
    %619 = vmatpush2.msra.mxu0 0.0
    %620 = vmatprep.subr.mxu0 0.0
    %621 = vmatpush2.msra.mxu0 0.0
    %622 = vmatprep.subr.mxu0 0.0
    %623 = vmatpush2.msra.mxu0 0.0
    %624 = vmatprep.subr.mxu0 0.0
    %625 = vmatpush2.msra.mxu0 0.0
    %626 = vmatprep.subr.mxu0 0.0
    %627 = vmatpush2.msra.mxu0 0.0
    %628 = vmatprep.subr.mxu0 0.0
    %629 = vmatpush2.msra.mxu0 0.0
    %630 = vmatprep.subr.mxu0 0.0
    %631 = vmatpush2.msra.mxu0 0.0
    %632 = vmatprep.subr.mxu0 0.0
    %633 = vmatpush2.msra.mxu0 0.0
    %634 = vmatprep.subr.mxu0 0.0
    %635 = vmatpush2.msra.mxu0 0.0
    %636 = vmatprep.subr.mxu0 0.0
    %637 = vmatpush2.msra.mxu0 0.0
    %638 = vmatprep.subr.mxu0 0.0
    %639 = vmatpush2.msra.mxu0 0.0
    %640 = vmatprep.subr.mxu0 0.0
    %641 = vmatpush2.msra.mxu0 0.0
    %642 = vmatprep.mubr.f32.mxu0 0.0
    %643 = vmatmul.mubr.f32.gmra.mxu0 %v576
    %v644 = vpop.f32.mrf.mxu0
    %v645 = vadd.f32 %v574, %v644
    %v646 = vpop.f32.mrf.mxu0
    %647 = vdwg.mxu0
    %v648 = vld [vmem:[#allocation7 + $0x38] sm:$0xff]
    %v649 = vld [vmem:[#allocation7 + $0x40] sm:$0xff]
    %v650 = vld [vmem:[#allocation7 + $0x48] sm:$0xff]
    %v651 = vld [vmem:[#allocation7 + $0x50] sm:$0xff]
    %v652 = vld [vmem:[#allocation7 + $0x58] sm:$0xff]
    %v653 = vld [vmem:[#allocation7 + $0x60] sm:$0xff]
    %v654 = vld [vmem:[#allocation7 + $0x68] sm:$0xff]
    %v655 = vld [vmem:[#allocation7 + $0x70] sm:$0xff]
    %v656 = vld [vmem:[#allocation7 + $0x78] sm:$0xff]
    %v657 = vld [vmem:[#allocation7 + $0x80] sm:$0xff]
    %v658 = vld [vmem:[#allocation7 + $0x88] sm:$0xff]
    %v659 = vld [vmem:[#allocation7 + $0x90] sm:$0xff]
    %v660 = vld [vmem:[#allocation7 + $0x98] sm:$0xff]
    %v661 = vld [vmem:[#allocation7 + $0xa0] sm:$0xff]
    %v662 = vld [vmem:[#allocation7 + $0xa8] sm:$0xff]
    %v663 = vld [vmem:[#allocation7 + $0xb0] sm:$0xff]
    %v664 = vld [vmem:[#allocation7 + $0xb8] sm:$0xff]
    %v665 = vld [vmem:[#allocation7 + $0xc0] sm:$0xff]
    %v666 = vld [vmem:[#allocation7 + $0xcb] sm:$0x1]
    %v668 = vsel %vm64, %v645, 0
    %670 = vmatprep.subr.mxu0 0.0
    %671 = vmatpush1.msra.mxu0 0.0
    %672 = vmatprep.subr.mxu0 0.0
    %673 = vmatpush1.msra.mxu0 0.0
    %674 = vmatprep.subr.mxu0 0.0
    %675 = vmatpush1.msra.mxu0 0.0
    %676 = vmatprep.subr.mxu0 0.0
    %677 = vmatpush1.msra.mxu0 0.0
    %678 = vmatprep.subr.mxu0 0.0
    %679 = vmatpush1.msra.mxu0 0.0
    %680 = vmatprep.subr.mxu0 0.0
    %681 = vmatpush1.msra.mxu0 0.0
    %682 = vmatprep.subr.mxu0 0.0
    %683 = vmatpush1.msra.mxu0 0.0
    %684 = vmatprep.subr.mxu0 0.0
    %685 = vmatpush1.msra.mxu0 0.0
    %686 = vmatprep.subr.mxu0 0.0
    %687 = vmatpush1.msra.mxu0 0.0
    %688 = vmatprep.subr.mxu0 0.0
    %689 = vmatpush1.msra.mxu0 0.0
    %690 = vmatprep.subr.mxu0 0.0
    %691 = vmatpush1.msra.mxu0 0.0
    %692 = vmatprep.subr.mxu0 0.0
    %693 = vmatpush1.msra.mxu0 0.0
    %694 = vmatprep.subr.mxu0 0.0
    %695 = vmatpush1.msra.mxu0 0.0
    %696 = vmatprep.subr.mxu0 0.0
    %697 = vmatpush1.msra.mxu0 0.0
    %698 = vmatprep.subr.mxu0 0.0
    %699 = vmatpush1.msra.mxu0 %v649
    %700 = vmatprep.subr.mxu0 0.0
    %701 = vmatpush1.msra.mxu0 %v648
    %702 = vmatprep.subr.mxu0 0.0
    %703 = vmatpush2.msra.mxu0 0.0
    %704 = vmatprep.subr.mxu0 0.0
    %705 = vmatpush2.msra.mxu0 0.0
    %706 = vmatprep.subr.mxu0 0.0
    %707 = vmatpush2.msra.mxu0 0.0
    %708 = vmatprep.subr.mxu0 0.0
    %709 = vmatpush2.msra.mxu0 0.0
    %710 = vmatprep.subr.mxu0 0.0
    %711 = vmatpush2.msra.mxu0 0.0
    %712 = vmatprep.subr.mxu0 0.0
    %713 = vmatpush2.msra.mxu0 0.0
    %714 = vmatprep.subr.mxu0 0.0
    %715 = vmatpush2.msra.mxu0 0.0
    %716 = vmatprep.subr.mxu0 0.0
    %717 = vmatpush2.msra.mxu0 0.0
    %718 = vmatprep.subr.mxu0 0.0
    %719 = vmatpush2.msra.mxu0 0.0
    %720 = vmatprep.subr.mxu0 0.0
    %721 = vmatpush2.msra.mxu0 0.0
    %722 = vmatprep.subr.mxu0 0.0
    %723 = vmatpush2.msra.mxu0 0.0
    %724 = vmatprep.subr.mxu0 0.0
    %725 = vmatpush2.msra.mxu0 0.0
    %726 = vmatprep.subr.mxu0 0.0
    %727 = vmatpush2.msra.mxu0 0.0
    %728 = vmatprep.subr.mxu0 0.0
    %729 = vmatpush2.msra.mxu0 0.0
    %730 = vmatprep.subr.mxu0 0.0
    %731 = vmatpush2.msra.mxu0 0.0
    %732 = vmatprep.subr.mxu0 0.0
    %733 = vmatpush2.msra.mxu0 0.0
    %734 = vmatprep.mubr.f32.mxu0 0.0
    %735 = vmatmul.mubr.f32.gmra.mxu0 %v668
    %v736 = vpop.f32.mrf.mxu0
    %v737 = vadd.f32 0.0, %v736
    %v738 = vpop.f32.mrf.mxu0
    %739 = vdwg.mxu0
    %740 = vrot.lane.b32.xlu0 %v645, 16
    %v741 = vpop.permute.xlu0 %740
    %743 = vrot.lane.b32.xlu0 %v645, 32
    %v744 = vpop.permute.xlu0 %743
    %746 = vrot.lane.b32.xlu0 %v645, 48
    %v747 = vpop.permute.xlu0 %746
    %749 = vrot.lane.b32.xlu0 %v645, 64
    %v750 = vpop.permute.xlu0 %749
    %752 = vrot.lane.b32.xlu0 %v645, 80
    %v753 = vpop.permute.xlu0 %752
    %755 = vrot.lane.b32.xlu0 %v645, 96
    %v756 = vpop.permute.xlu0 %755
    %758 = vrot.lane.b32.xlu0 %v645, 112
    %v759 = vpop.permute.xlu0 %758
    %v761 = vsel %vm64, %v645, %v741
    %v762 = vsel %vm141, %v761, %v744
    %vm763 = vcmask 392192
    %v764 = vsel %vm763, %v762, %v747
    %vm765 = vcmask 523264
    %v766 = vsel %vm765, %v764, %v750
    %vm767 = vcmask 654336
    %v768 = vsel %vm767, %v766, %v753
    %vm769 = vcmask 785408
    %v770 = vsel %vm769, %v768, %v756
    %vm771 = vcmask 916480
    %v772 = vsel %vm771, %v770, %v759
    %v773 = vmul.f32 %v737, %v772
    %v774 = vlaneseq
    %v775 = vshrl.u32 %v774, 7
    %v776 = vsub.s32 0, %v775
    %v777 = vrot.slane %v666, %v776
    %778 = vmatprep.subr.mxu0 0.0
    %779 = vmatpush1.msra.mxu0 %v665
    %780 = vmatprep.subr.mxu0 0.0
    %781 = vmatpush1.msra.mxu0 %v664
    %782 = vmatprep.subr.mxu0 0.0
    %783 = vmatpush1.msra.mxu0 %v663
    %784 = vmatprep.subr.mxu0 0.0
    %785 = vmatpush1.msra.mxu0 %v662
    %786 = vmatprep.subr.mxu0 0.0
    %787 = vmatpush1.msra.mxu0 %v661
    %788 = vmatprep.subr.mxu0 0.0
    %789 = vmatpush1.msra.mxu0 %v660
    %790 = vmatprep.subr.mxu0 0.0
    %791 = vmatpush1.msra.mxu0 %v659
    %792 = vmatprep.subr.mxu0 0.0
    %793 = vmatpush1.msra.mxu0 %v658
    %794 = vmatprep.subr.mxu0 0.0
    %795 = vmatpush1.msra.mxu0 %v657
    %796 = vmatprep.subr.mxu0 0.0
    %797 = vmatpush1.msra.mxu0 %v656
    %798 = vmatprep.subr.mxu0 0.0
    %799 = vmatpush1.msra.mxu0 %v655
    %800 = vmatprep.subr.mxu0 0.0
    %801 = vmatpush1.msra.mxu0 %v654
    %802 = vmatprep.subr.mxu0 0.0
    %803 = vmatpush1.msra.mxu0 %v653
    %804 = vmatprep.subr.mxu0 0.0
    %805 = vmatpush1.msra.mxu0 %v652
    %806 = vmatprep.subr.mxu0 0.0
    %807 = vmatpush1.msra.mxu0 %v651
    %808 = vmatprep.subr.mxu0 0.0
    %809 = vmatpush1.msra.mxu0 %v650
    %810 = vmatprep.subr.mxu0 0.0
    %811 = vmatpush2.msra.mxu0 0.0
    %812 = vmatprep.subr.mxu0 0.0
    %813 = vmatpush2.msra.mxu0 0.0
    %814 = vmatprep.subr.mxu0 0.0
    %815 = vmatpush2.msra.mxu0 0.0
    %816 = vmatprep.subr.mxu0 0.0
    %817 = vmatpush2.msra.mxu0 0.0
    %818 = vmatprep.subr.mxu0 0.0
    %819 = vmatpush2.msra.mxu0 0.0
    %820 = vmatprep.subr.mxu0 0.0
    %821 = vmatpush2.msra.mxu0 0.0
    %822 = vmatprep.subr.mxu0 0.0
    %823 = vmatpush2.msra.mxu0 0.0
    %824 = vmatprep.subr.mxu0 0.0
    %825 = vmatpush2.msra.mxu0 0.0
    %826 = vmatprep.subr.mxu0 0.0
    %827 = vmatpush2.msra.mxu0 0.0
    %828 = vmatprep.subr.mxu0 0.0
    %829 = vmatpush2.msra.mxu0 0.0
    %830 = vmatprep.subr.mxu0 0.0
    %831 = vmatpush2.msra.mxu0 0.0
    %832 = vmatprep.subr.mxu0 0.0
    %833 = vmatpush2.msra.mxu0 0.0
    %834 = vmatprep.subr.mxu0 0.0
    %835 = vmatpush2.msra.mxu0 0.0
    %836 = vmatprep.subr.mxu0 0.0
    %837 = vmatpush2.msra.mxu0 0.0
    %838 = vmatprep.subr.mxu0 0.0
    %839 = vmatpush2.msra.mxu0 0.0
    %840 = vmatprep.subr.mxu0 0.0
    %841 = vmatpush2.msra.mxu0 0.0
    %842 = vmatprep.mubr.f32.mxu0 0.0
    %843 = vmatmul.mubr.f32.gmra.mxu0 %v773
    %v844 = vpop.f32.mrf.mxu0
    %v845 = vadd.f32 %v777, %v844
    %v846 = vpop.f32.mrf.mxu0
    %847 = vdwg.mxu0
    %v848 = vxor.u32 %v845, 2147483648
    %v849 = vmul.f32 %v848, 1.442695
    %v850 = vpow.pop %v849
    %v851 = vadd.f32 %v850, 1.0
    %v852 = vrcp.pop %v851
    %v853 = vmul.f32 1.0, %v852
    %854 = vrot.lane.b32.xlu0 %v566, 8
    %v855 = vpop.permute.xlu0 %854
    %v857 = vsel %vm218, %v853, %v855
    %v858 = vsel %vm64, %v857, 0.0
    %859 = vst [vmem:[#allocation8] sm:$0xff] %v858
    // Predicated region
    $region26: #{tpu_custom_call.1} parent=1 // pred_check
      _
    $region27: #{tpu_custom_call.1} parent=1 // pred_check_branch
      %861 = sbr.rel (0) target = $region29
    $region28: #{tpu_custom_call.1} parent=1 // pred_region
      %s863 = ssub.s32 128, 128
      %864 = vsyncadd [#allocation4], %s863
      %s866 = sshll.u32 [#allocation8], 4
      %s867 = int_to_ptr.vmem [resolvable:$true] %s866
      %869 = dma.vmem_to_hbm [thread:$0]  %s867, 128, %s3, [#allocation4]
    $region29: #{tpu_custom_call.1} parent=1 // pred_fallthru
      _
    // Predicated region
    $region30: #{tpu_custom_call.1} parent=1 // pred_check
      _
    $region31: #{tpu_custom_call.1} parent=1 // pred_check_branch
      %871 = sbr.rel (0) target = $region33
    $region32: #{tpu_custom_call.1} parent=1 // pred_region
      %872 = dma.done [#allocation4], 128
    $region33: #{tpu_custom_call.1} parent=1 // pred_fallthru
      _
    %873 = vsyncpa [#allocation3], 1
    %874 = vsyncpa [#allocation6], 1
    %875 = vsyncpa [#allocation4], 1

</llo_original>
